<compile_context>
chip_gen: v5e
topology: v5e:2x2
jax: 0.10.0
libtpu: 0.0.40
codegen_flags: <defaults>
</compile_context>

<pallas_src>
import math

import jax
import jax.numpy as jnp
from jax import lax
from jax.experimental import pallas as pl
from jax.experimental.pallas import tpu as pltpu

_INV_SQRT2 = 1.0 / math.sqrt(2.0)


def _mlp_layer_kernel(x_ref, w_ref, b_ref, o_ref):
    """One row-tile: y = GELU(x @ W^T + b + x); Dropout(p=0.0) is the identity.

    x_ref: [TM, K]   rows on sublanes, features on lanes (K padded to 128)
    w_ref: [N, K]    PyTorch Linear layout (no wrapper-side transpose)
    b_ref: [1, N]
    o_ref: [TM, N]
    """
    x = x_ref[...]
    w = w_ref[...]
    # MXU matmul in native dtype with f32 accumulation; contract x's last dim
    # against w's last dim (equivalent to x @ W^T) so W is never transposed.
    y = lax.dot_general(
        x, w,
        dimension_numbers=(((1,), (1,)), ((), ())),
        preferred_element_type=jnp.float32,
    )
    # f32 epilogue: bias + residual + exact (erf-based) GELU.
    y = y + b_ref[...].astype(jnp.float32)
    y = y + x.astype(jnp.float32)            # residual (requires in_dim == out_dim)
    y = 0.5 * y * (1.0 + lax.erf(y * _INV_SQRT2))
    # Dropout with p=0.0 is a no-op.
    o_ref[...] = y.astype(o_ref.dtype)


def _round_up(a: int, b: int) -> int:
    return (a + b - 1) // b * b


def mlp_layer(x, weight, bias, *, tm_max=1024):
    """x: [..., in_dim]; weight: [out_dim, in_dim] (PyTorch layout); bias: [out_dim]."""
    *lead, in_dim = x.shape
    out_dim, w_in = weight.shape
    assert w_in == in_dim, "weight must be [out_dim, in_dim]"
    assert in_dim == out_dim, "residual=True requires in_dim == out_dim"

    rows = int(math.prod(lead)) if lead else 1
    itemsize = jnp.dtype(x.dtype).itemsize

    # Lane-dense feature dims: pad K and N to multiples of 128.
    kp = _round_up(in_dim, 128)
    np_ = _round_up(out_dim, 128)

    # Row-tile: largest multiple of 8 sublanes keeping
    #   (double-buffered x/out tiles) + resident W + bias
    # under a budget that also fits v7x's 64 MiB per-TC VMEM.
    vmem_budget = 40 * 1024 * 1024
    w_bytes = np_ * kp * jnp.dtype(weight.dtype).itemsize
    b_bytes = np_ * jnp.dtype(bias.dtype).itemsize
    per_row = 2 * (kp + np_) * itemsize       # x tile + out tile, double-buffered
    avail = max(vmem_budget - 2 * w_bytes - 2 * b_bytes, 1 << 20)
    tm = max(8, min(tm_max, (avail // per_row) // 8 * 8))
    tm = min(tm, _round_up(rows, 8))          # never tile bigger than the input
    rows_p = _round_up(rows, tm)

    # Pad rows / features (zero rows and zero K/N columns do not affect the
    # valid region; padded output is sliced off below).
    x2d = x.reshape(rows, in_dim)
    if (rows_p, kp) != (rows, in_dim):
        x2d = jnp.pad(x2d, ((0, rows_p - rows), (0, kp - in_dim)))
    w_p = weight
    if (np_, kp) != (out_dim, in_dim):
        w_p = jnp.pad(weight, ((0, np_ - out_dim), (0, kp - in_dim)))
    b_p = bias if np_ == out_dim else jnp.pad(bias, (0, np_ - out_dim))
    b2d = b_p.reshape(1, np_)

    grid = (rows_p // tm,)

    cost = pl.CostEstimate(
        flops=2 * rows_p * kp * np_,
        transcendentals=rows_p * np_,
        bytes_accessed=int((rows_p * kp + np_ * kp + np_ + rows_p * np_) * itemsize),
    )

    # Scoped-VMEM limit with headroom, kept below v7x's 64 MiB physical VMEM.
    vmem_est = 2 * tm * (kp + np_) * itemsize + 2 * w_bytes + 2 * b_bytes
    vmem_limit = int(min(max(vmem_est + (8 << 20), 32 << 20), 60 << 20))

    out = pl.pallas_call(
        _mlp_layer_kernel,
        out_shape=jax.ShapeDtypeStruct((rows_p, np_), x.dtype),
        grid=grid,
        in_specs=[
            pl.BlockSpec((tm, kp), lambda i: (i, 0)),      # x row-tile (pipelined)
            pl.BlockSpec((np_, kp), lambda i: (0, 0)),     # full weight, resident
            pl.BlockSpec((1, np_), lambda i: (0, 0)),      # bias, resident
        ],
        out_specs=pl.BlockSpec((tm, np_), lambda i: (i, 0)),
        compiler_params=pltpu.CompilerParams(
            dimension_semantics=("parallel",),
            vmem_limit_bytes=vmem_limit,
        ),
        cost_estimate=cost,
    )(x2d, w_p, b2d)

    out = out[:rows, :out_dim]
    return out.reshape(*lead, out_dim)


if __name__ == "__main__":
    # Small shapes implied by the module: batch=2, seq=8, hidden=32 (in_dim == out_dim).
    batch, seq, hidden = 2, 8, 32

    key = jax.random.PRNGKey(0)
    kx, kw, kb = jax.random.split(key, 3)

    x = jax.random.normal(kx, (batch, seq, hidden), dtype=jnp.float32)

    # Deterministic PyTorch-style Linear init: U(-1/sqrt(in_dim), 1/sqrt(in_dim)).
    bound = 1.0 / math.sqrt(hidden)
    weight = jax.random.uniform(kw, (hidden, hidden), jnp.float32, -bound, bound)
    bias = jax.random.uniform(kb, (hidden,), jnp.float32, -bound, bound)

    out = mlp_layer(x, weight, bias)
    jax.block_until_ready(out)

    # Pure-JAX reference check of the fused semantics (exact-GELU, dropout p=0).
    ref = jax.nn.gelu(x @ weight.T + bias + x, approximate=False)
    assert out.shape == (batch, seq, hidden)
    assert jnp.allclose(out, ref, atol=1e-5, rtol=1e-5)

    print("KERNEL_OK")
</pallas_src>

<mosaic_0001>
module attributes {stable_mosaic.version = 11 : i64} {
  func.func @_mlp_layer_kernel(%arg0: i32, %arg1: memref<16x128xf32, #tpu.memory_space<vmem>>, %arg2: memref<128x128xf32, #tpu.memory_space<vmem>>, %arg3: memref<1x128xf32, #tpu.memory_space<vmem>>, %arg4: memref<16x128xf32, #tpu.memory_space<vmem>>) attributes {dimension_semantics = [#tpu.dimension_semantics<parallel>], iteration_bounds = array<i64: 1>, scalar_prefetch = 0 : i64, scratch_operands = 0 : i64, tpu.core_type = #tpu.core_type<tc>, window_params = [{transform_indices = @transform_0, window_bounds = array<i64: 16, 128>}, {pipeline_mode = #tpu.pipeline_mode<synchronous>, transform_indices = @transform_1, window_bounds = array<i64: 128, 128>}, {pipeline_mode = #tpu.pipeline_mode<synchronous>, transform_indices = @transform_2, window_bounds = array<i64: 1, 128>}, {transform_indices = @transform_3, window_bounds = array<i64: 16, 128>}]} {
    %c0 = arith.constant 0 : index
    %c0_0 = arith.constant 0 : index
    %0 = vector.load %arg1[%c0, %c0_0] : memref<16x128xf32, #tpu.memory_space<vmem>>, vector<16x128xf32>
    %c0_1 = arith.constant 0 : index
    %c0_2 = arith.constant 0 : index
    %1 = vector.load %arg2[%c0_1, %c0_2] : memref<128x128xf32, #tpu.memory_space<vmem>>, vector<128x128xf32>
    %cst = arith.constant dense<0.000000e+00> : vector<16x128xf32>
    %2 = tpu.matmul %0, %1, %cst {dimension_numbers = #tpu.dot_dimension_numbers<[1], [1], [0], [0], [0, 0, 1, 0], [], []>} : vector<16x128xf32>, vector<128x128xf32>, vector<16x128xf32> -> vector<16x128xf32>
    %c0_3 = arith.constant 0 : index
    %c0_4 = arith.constant 0 : index
    %3 = vector.load %arg3[%c0_3, %c0_4] : memref<1x128xf32, #tpu.memory_space<vmem>>, vector<1x128xf32>
    %4 = vector.broadcast %3 : vector<1x128xf32> to vector<16x128xf32>
    %5 = arith.addf %2, %4 : vector<16x128xf32>
    %6 = arith.addf %5, %0 : vector<16x128xf32>
    %cst_5 = arith.constant 5.000000e-01 : f32
    %7 = vector.broadcast %cst_5 : f32 to vector<16x128xf32>
    %8 = arith.mulf %7, %6 : vector<16x128xf32>
    %cst_6 = arith.constant 0.707106769 : f32
    %9 = vector.broadcast %cst_6 : f32 to vector<16x128xf32>
    %10 = arith.mulf %6, %9 : vector<16x128xf32>
    %11 = math.erf %10 : vector<16x128xf32>
    %cst_7 = arith.constant 1.000000e+00 : f32
    %12 = vector.broadcast %cst_7 : f32 to vector<16x128xf32>
    %13 = arith.addf %12, %11 : vector<16x128xf32>
    %14 = arith.mulf %8, %13 : vector<16x128xf32>
    %c0_8 = arith.constant 0 : index
    %c0_9 = arith.constant 0 : index
    %15 = vector.load %arg4[%c0_8, %c0_9] : memref<16x128xf32, #tpu.memory_space<vmem>>, vector<16x128xf32>
    tpu.vector_store %arg4[%c0_8, %c0_9], %14 {strides = array<i32>} : memref<16x128xf32, #tpu.memory_space<vmem>>, vector<16x128xf32>,
    return
  }
  func.func @transform_0(%arg0: i32) -> (i32, i32) {
    %c0_i32 = arith.constant 0 : i32
    %c0_i32_0 = arith.constant 0 : i32
    return %arg0, %c0_i32 : i32, i32
  }
  func.func @transform_1(%arg0: i32) -> (i32, i32) {
    %c0_i32 = arith.constant 0 : i32
    %c0_i32_0 = arith.constant 0 : i32
    %c0_i32_1 = arith.constant 0 : i32
    return %c0_i32, %c0_i32_0 : i32, i32
  }
  func.func @transform_2(%arg0: i32) -> (i32, i32) {
    %c0_i32 = arith.constant 0 : i32
    %c0_i32_0 = arith.constant 0 : i32
    %c0_i32_1 = arith.constant 0 : i32
    return %c0_i32, %c0_i32_0 : i32, i32
  }
  func.func @transform_3(%arg0: i32) -> (i32, i32) {
    %c0_i32 = arith.constant 0 : i32
    %c0_i32_0 = arith.constant 0 : i32
    return %arg0, %c0_i32 : i32, i32
  }
}

</mosaic_0001>

<llo_original>
// kernel: tpu_custom_call.1
$region0: #{tpu_custom_call.1}
  #allocation0 [shape = 'u32[]', space=smem, size = 0x4, offset = 0x4, fixed_abs, tag = 'smem constant byte address 0x4 - core index']
  #allocation1 [shape = 'u32[72,128]{1,0:T(1,128)}', space=vmem, size = 0x9000, scoped, tag = 'internal scratch']
  %s0 = inlined_call_operand.hbm [shape: f32[16,128], index: 0, kind: input, shape index: {}]
  %s1 = inlined_call_operand.hbm [shape: f32[128,128], index: 1, kind: input, shape index: {}]
  %s2 = inlined_call_operand.vmem [shape: f32[1,128], index: 2, kind: input, shape index: {}]
  %s3 = inlined_call_operand.hbm [shape: f32[16,128], index: 3, kind: output, shape index: {}]
  %s4 = sld [smem:[#allocation0]]
  $region30: #{tpu_custom_call.1} parent=0
    _
  %s6 = ssub.s32 1, %s4
  %s7 = scalar_select 0, %s6, %s4
  $region1: #{tpu_custom_call.1} parent=0
    #allocation2 [shape = 'u8[8192]{0}', space=vmem, size = 0x2000, scoped, tag = 'input window, operand 0, single buffered']
    #allocation3 [shape = 's32[1]{0}', space=sflag, size = 0x4, scoped, tag = 'scoped memory for tpu_custom_call.1']
    #allocation4 [shape = 's32[1]{0}', space=sflag, size = 0x4, scoped, tag = 'scoped memory for tpu_custom_call.1']
    #allocation5 [shape = 'u8[65536]{0}', space=vmem, size = 0x10000, scoped, tag = 'input window, operand 1, single buffered']
    #allocation6 [shape = 's32[1]{0}', space=sflag, size = 0x4, scoped, tag = 'scoped memory for tpu_custom_call.1']
    #allocation7 [shape = 'u8[8192]{0}', space=vmem, size = 0x2000, scoped, tag = 'output window, operand 0, single buffered']
    %8 = vsyncpa [#allocation3], 0
    %9 = vsyncpa [#allocation6], 0
    %10 = vsyncpa [#allocation4], 0
    // Predicated region
    $region2: #{tpu_custom_call.1} parent=1 // pred_check
      _
    $region3: #{tpu_custom_call.1} parent=1 // pred_check_branch
      %12 = sbr.rel (0) target = $region5
    $region4: #{tpu_custom_call.1} parent=1 // pred_region
      %14 = vsyncadd [#allocation3], 0
      %s15 = sshll.u32 %s0, 4
      %s16 = int_to_ptr.hbm [resolvable:$true] %s15
      %s17 = sshll.u32 [#allocation2], 4
      %s18 = int_to_ptr.vmem [resolvable:$true] %s17
      %23 = dma.hbm_to_vmem [thread:$0]  %s16, 256, %s18, [#allocation3], 128, 128, 8
    $region5: #{tpu_custom_call.1} parent=1 // pred_fallthru
      _
    // Predicated region
    $region6: #{tpu_custom_call.1} parent=1 // pred_check
      _
    $region7: #{tpu_custom_call.1} parent=1 // pred_check_branch
      %25 = sbr.rel (0) target = $region9
    $region8: #{tpu_custom_call.1} parent=1 // pred_region
      %27 = vsyncadd [#allocation6], 0
      %s28 = sshll.u32 %s1, 4
      %s29 = int_to_ptr.hbm [resolvable:$true] %s28
      %s30 = sshll.u32 [#allocation5], 4
      %s31 = int_to_ptr.vmem [resolvable:$true] %s30
      %36 = dma.hbm_to_vmem [thread:$0]  %s29, 2048, %s31, [#allocation6], 128, 128, 8
    $region9: #{tpu_custom_call.1} parent=1 // pred_fallthru
      _
    // Predicated region
    $region10: #{tpu_custom_call.1} parent=1 // pred_check
      _
    $region11: #{tpu_custom_call.1} parent=1 // pred_check_branch
      %38 = sbr.rel (0) target = $region13
    $region12: #{tpu_custom_call.1} parent=1 // pred_region
      _
    $region13: #{tpu_custom_call.1} parent=1 // pred_fallthru
      _
    // Predicated region
    $region14: #{tpu_custom_call.1} parent=1 // pred_check
      _
    $region15: #{tpu_custom_call.1} parent=1 // pred_check_branch
      %40 = sbr.rel (0) target = $region17
    $region16: #{tpu_custom_call.1} parent=1 // pred_region
      %42 = dma.done [#allocation3], 256
    $region17: #{tpu_custom_call.1} parent=1 // pred_fallthru
      _
    // Predicated region
    $region18: #{tpu_custom_call.1} parent=1 // pred_check
      _
    $region19: #{tpu_custom_call.1} parent=1 // pred_check_branch
      %44 = sbr.rel (0) target = $region21
    $region20: #{tpu_custom_call.1} parent=1 // pred_region
      %46 = dma.done [#allocation6], 2048
    $region21: #{tpu_custom_call.1} parent=1 // pred_fallthru
      _
    %v47 = vld [vmem:[#allocation2] sm:$0xff]
    %v48 = vld [vmem:[#allocation2 + $0x8] sm:$0xff]
    %v49 = vld [vmem:[#allocation5] sm:$0xff]
    %v50 = vld [vmem:[#allocation5 + $0x8] sm:$0xff]
    %v51 = vld [vmem:[#allocation5 + $0x10] sm:$0xff]
    %v52 = vld [vmem:[#allocation5 + $0x18] sm:$0xff]
    %v53 = vld [vmem:[#allocation5 + $0x20] sm:$0xff]
    %v54 = vld [vmem:[#allocation5 + $0x28] sm:$0xff]
    %v55 = vld [vmem:[#allocation5 + $0x30] sm:$0xff]
    %v56 = vld [vmem:[#allocation5 + $0x38] sm:$0xff]
    %v57 = vld [vmem:[#allocation5 + $0x40] sm:$0xff]
    %v58 = vld [vmem:[#allocation5 + $0x48] sm:$0xff]
    %v59 = vld [vmem:[#allocation5 + $0x50] sm:$0xff]
    %v60 = vld [vmem:[#allocation5 + $0x58] sm:$0xff]
    %v61 = vld [vmem:[#allocation5 + $0x60] sm:$0xff]
    %v62 = vld [vmem:[#allocation5 + $0x68] sm:$0xff]
    %v63 = vld [vmem:[#allocation5 + $0x70] sm:$0xff]
    %v64 = vld [vmem:[#allocation5 + $0x78] sm:$0xff]
    %v65 = vld [vmem:[%s2] sm:$0x1]
    %v67 = vperm.slane %v65, 0
    %69 = vmatpush.xpose.msra.mxu0 %v64
    %70 = vmatpush.xpose.msra.mxu0 %v63
    %71 = vmatpush.xpose.msra.mxu0 %v62
    %72 = vmatpush.xpose.msra.mxu0 %v61
    %73 = vmatpush.xpose.msra.mxu0 %v60
    %74 = vmatpush.xpose.msra.mxu0 %v59
    %75 = vmatpush.xpose.msra.mxu0 %v58
    %76 = vmatpush.xpose.msra.mxu0 %v57
    %77 = vmatpush.xpose.msra.mxu0 %v56
    %78 = vmatpush.xpose.msra.mxu0 %v55
    %79 = vmatpush.xpose.msra.mxu0 %v54
    %80 = vmatpush.xpose.msra.mxu0 %v53
    %81 = vmatpush.xpose.msra.mxu0 %v52
    %82 = vmatpush.xpose.msra.mxu0 %v51
    %83 = vmatpush.xpose.msra.mxu0 %v50
    %84 = vmatpush.xpose.msra.mxu0 %v49
    %85 = vmatmul.f32.gmra.mxu0 %v47
    %v86 = vpop.f32.mrf.mxu0
    %v87 = vadd.f32 %v67, %v86
    %88 = vmatmul.f32.gmra.mxu0 %v48
    %v89 = vpop.f32.mrf.mxu0
    %v90 = vadd.f32 %v67, %v89
    %91 = vdwg.mxu0
    %v92 = vadd.f32 %v87, %v47
    %v93 = vadd.f32 %v90, %v48
    %v94 = vmul.f32 %v92, 0.5
    %v95 = vmul.f32 %v93, 0.5
    %v96 = vmul.f32 %v92, 0.70710677
    %v97 = vmul.f32 %v93, 0.70710677
    %v98 = vmul.f32 %v96, %v96
    %v99 = vmin.f32 16.0, %v98
    %v100 = vmul.f32 %v99, 2.1237322e-06
    %v101 = vadd.f32 %v100, 0.00028619796
    %v102 = vmul.f32 %v99, %v101
    %v103 = vadd.f32 %v102, 0.0036580483
    %v104 = vmul.f32 %v99, %v103
    %v105 = vadd.f32 %v104, 0.05243302
    %v106 = vmul.f32 %v99, %v105
    %v107 = vadd.f32 %v106, 0.18741608
    %v108 = vmul.f32 %v99, %v107
    %v109 = vadd.f32 %v108, 1.1283791
    %v110 = vmul.f32 %v96, %v109
    %v111 = vmul.f32 %v99, 3.8918573e-05
    %v112 = vadd.f32 %v111, 0.001143296
    %v113 = vmul.f32 %v99, %v112
    %v114 = vadd.f32 %v113, 0.014752088
    %v115 = vmul.f32 %v99, %v114
    %v116 = vadd.f32 %v115, 0.112945676
    %v117 = vmul.f32 %v99, %v116
    %v118 = vadd.f32 %v117, 0.4994258
    %v119 = vmul.f32 %v99, %v118
    %v120 = vadd.f32 %v119, 1.0
    %v121 = vrcp.pop %v120
    %v122 = vmul.f32 %v120, %v121
    %v123 = vsub.f32 1.0, %v122
    %v124 = vmul.f32 %v121, %v123
    %v125 = vadd.f32 %v121, %v124
    %vm126 = vweird.f32 %v120
    %vm127 = vweird.f32 %v121
    %vm128 = vmor %vm126, %vm127
    %v129 = vsel %vm128, %v121, %v125
    %v130 = vand.u32 2147483647, %v120
    %vm131 = vcmp.eq.f32.partialorder %v130, 8.507059e+37
    %v132 = vand.u32 %v120, 2147483648
    %v133 = vor.u32 1.1754944e-38, %v132
    %v134 = vsel %vm131, %v133, %v129
    %v135 = vmul.f32 %v110, %v134
    %v136 = vmin.f32 %v135, 1.0
    %v137 = vmax.f32 %v136, -1.0
    %v138 = vmul.f32 %v97, %v97
    %v139 = vmin.f32 16.0, %v138
    %v140 = vmul.f32 %v139, 2.1237322e-06
    %v141 = vadd.f32 %v140, 0.00028619796
    %v142 = vmul.f32 %v139, %v141
    %v143 = vadd.f32 %v142, 0.0036580483
    %v144 = vmul.f32 %v139, %v143
    %v145 = vadd.f32 %v144, 0.05243302
    %v146 = vmul.f32 %v139, %v145
    %v147 = vadd.f32 %v146, 0.18741608
    %v148 = vmul.f32 %v139, %v147
    %v149 = vadd.f32 %v148, 1.1283791
    %v150 = vmul.f32 %v97, %v149
    %v151 = vmul.f32 %v139, 3.8918573e-05
    %v152 = vadd.f32 %v151, 0.001143296
    %v153 = vmul.f32 %v139, %v152
    %v154 = vadd.f32 %v153, 0.014752088
    %v155 = vmul.f32 %v139, %v154
    %v156 = vadd.f32 %v155, 0.112945676
    %v157 = vmul.f32 %v139, %v156
    %v158 = vadd.f32 %v157, 0.4994258
    %v159 = vmul.f32 %v139, %v158
    %v160 = vadd.f32 %v159, 1.0
    %v161 = vrcp.pop %v160
    %v162 = vmul.f32 %v160, %v161
    %v163 = vsub.f32 1.0, %v162
    %v164 = vmul.f32 %v161, %v163
    %v165 = vadd.f32 %v161, %v164
    %vm166 = vweird.f32 %v160
    %vm167 = vweird.f32 %v161
    %vm168 = vmor %vm166, %vm167
    %v169 = vsel %vm168, %v161, %v165
    %v170 = vand.u32 2147483647, %v160
    %vm171 = vcmp.eq.f32.partialorder %v170, 8.507059e+37
    %v172 = vand.u32 %v160, 2147483648
    %v173 = vor.u32 1.1754944e-38, %v172
    %v174 = vsel %vm171, %v173, %v169
    %v175 = vmul.f32 %v150, %v174
    %v176 = vmin.f32 %v175, 1.0
    %v177 = vmax.f32 %v176, -1.0
    %v178 = vadd.f32 %v137, 1.0
    %v179 = vadd.f32 %v177, 1.0
    %v180 = vmul.f32 %v94, %v178
    %v181 = vmul.f32 %v95, %v179
    %182 = vst [vmem:[#allocation7] sm:$0xff] %v180
    %183 = vst [vmem:[#allocation7 + $0x8] sm:$0xff] %v181
    // Predicated region
    $region22: #{tpu_custom_call.1} parent=1 // pred_check
      _
    $region23: #{tpu_custom_call.1} parent=1 // pred_check_branch
      %185 = sbr.rel (0) target = $region25
    $region24: #{tpu_custom_call.1} parent=1 // pred_region
      %187 = vsyncadd [#allocation4], 0
      %s188 = sshll.u32 [#allocation7], 4
      %s189 = int_to_ptr.vmem [resolvable:$true] %s188
      %s190 = sshll.u32 %s3, 4
      %s191 = int_to_ptr.hbm [resolvable:$true] %s190
      %196 = dma.vmem_to_hbm [thread:$0]  %s189, 256, %s191, [#allocation4], 128, 128, 8
    $region25: #{tpu_custom_call.1} parent=1 // pred_fallthru
      _
    // Predicated region
    $region26: #{tpu_custom_call.1} parent=1 // pred_check
      _
    $region27: #{tpu_custom_call.1} parent=1 // pred_check_branch
      %198 = sbr.rel (0) target = $region29
    $region28: #{tpu_custom_call.1} parent=1 // pred_region
      %200 = dma.done [#allocation4], 256
    $region29: #{tpu_custom_call.1} parent=1 // pred_fallthru
      _
    %201 = vsyncpa [#allocation3], 1
    %202 = vsyncpa [#allocation6], 1
    %203 = vsyncpa [#allocation4], 1

</llo_original>
